<compile_context>
chip_gen: v7x
topology: tpu7x:2x2x1
jax: 0.10.0
libtpu: 0.0.40
codegen_flags: <defaults>
</compile_context>

<pallas_src>
import jax
import jax.numpy as jnp
from jax import lax
from jax.experimental import pallas as pl
from jax.experimental.pallas import tpu as pltpu

IN_DIM = 33
IN_PAD = 40      # 33 zero-padded up to a multiple of 8
HIDDEN = 128
OUT_DIM = 4
OUT_PAD = 128    # last layer zero-padded to a full lane width (dense stores)


def _round_up(n, m):
    return ((n + m - 1) // m) * m


def _make_mlp_kernel(tile_b, sub):
    n_sub = tile_b // sub

    def kernel(x_ref,
               w0_ref, b0_ref, w1_ref, b1_ref, w2_ref, b2_ref,
               w3_ref, b3_ref, w4_ref, b4_ref,
               o_ref):
        # Hoist bias loads/broadcasts out of the inner chunk loop (f32, tiny).
        b0 = b0_ref[...]
        b1 = b1_ref[...]
        b2 = b2_ref[...]
        b3 = b3_ref[...]
        b4 = b4_ref[...]

        def chunk(r):
            h = x_ref[pl.ds(r, sub), :]                              # (sub, 40) f32
            # bf16 at the MXU inputs, f32 accumulation, f32 VPU ops.
            h = jnp.dot(h.astype(jnp.bfloat16), w0_ref[...],
                        preferred_element_type=jnp.float32) + b0
            h = jnp.maximum(h, 0.0)
            h = jnp.dot(h.astype(jnp.bfloat16), w1_ref[...],
                        preferred_element_type=jnp.float32) + b1
            h = jnp.maximum(h, 0.0)
            h = jnp.dot(h.astype(jnp.bfloat16), w2_ref[...],
                        preferred_element_type=jnp.float32) + b2
            h = jnp.maximum(h, 0.0)
            h = jnp.dot(h.astype(jnp.bfloat16), w3_ref[...],
                        preferred_element_type=jnp.float32) + b3
            h = jnp.maximum(h, 0.0)
            out = jnp.dot(h.astype(jnp.bfloat16), w4_ref[...],
                          preferred_element_type=jnp.float32) + b4   # (sub, 128)
            o_ref[pl.ds(r, sub), :] = out.astype(o_ref.dtype)        # dense vst

        if n_sub == 1:
            chunk(0)
        else:
            def body(i, carry):
                chunk(pl.multiple_of(i * sub, sub))
                return carry
            # Unroll short inner loops so the LLO scheduler can overlap chunks.
            lax.fori_loop(0, n_sub, body, 0, unroll=(n_sub <= 8))

    return kernel


def actor_high_forward(x, params, *, tile_b=2048, sub=256):
    """x: (B, 33) f32.

    params: [(W bf16 (in,out)), (b f32 (1,out))] x 5, with W0 padded to (40,128)
    and the last layer padded to (128,128)/(1,128).  Returns (B, 4) f32.
    """
    B = x.shape[0]
    assert x.shape[1] == IN_DIM

    # Clamp tiles to the (padded) batch so tiny batches don't over-allocate.
    sub = _round_up(max(8, min(sub, _round_up(B, 8))), 8)
    tile_b = _round_up(max(sub, min(tile_b, _round_up(B, sub))), sub)
    b_pad = _round_up(B, tile_b)
    grid = (b_pad // tile_b,)

    # Pad features 33 -> 40 and batch up to a multiple of the tile (zeros; rows
    # sliced off below).
    x_p = jnp.pad(x, ((0, b_pad - B), (0, IN_PAD - IN_DIM)))

    flat = []
    in_specs = [pl.BlockSpec((tile_b, IN_PAD), lambda i: (i, 0))]
    for (w, b) in params:
        flat += [w, b]
        # Constant index_map => weights/biases stay VMEM-resident across steps.
        in_specs.append(pl.BlockSpec(w.shape, lambda i: (0, 0)))
        in_specs.append(pl.BlockSpec(b.shape, lambda i: (0, 0)))

    out = pl.pallas_call(
        _make_mlp_kernel(tile_b, sub),
        out_shape=jax.ShapeDtypeStruct((b_pad, OUT_PAD), jnp.float32),
        grid=grid,
        in_specs=in_specs,
        out_specs=pl.BlockSpec((tile_b, OUT_PAD), lambda i: (i, 0)),
        compiler_params=pltpu.CompilerParams(
            dimension_semantics=("parallel",)),   # megacore batch sharding on v7x
    )(x_p, *flat)
    return out[:B, :OUT_DIM]


def init_params(key):
    """Torch-style Linear init (W stored (out,in) then transposed), weights cast to bf16.

    W0 is zero-padded along K (33 -> 40); the last layer is zero-padded along N
    (4 -> 128) so the kernel's output stores are lane-dense.
    """
    layer_dims = [(IN_DIM, HIDDEN), (HIDDEN, HIDDEN), (HIDDEN, HIDDEN),
                  (HIDDEN, HIDDEN), (HIDDEN, OUT_DIM)]
    params = []
    n_layers = len(layer_dims)
    for li, (fan_in, fan_out) in enumerate(layer_dims):
        key, kw, kb = jax.random.split(key, 3)
        bound = 1.0 / (fan_in ** 0.5)
        w = jax.random.uniform(kw, (fan_out, fan_in), jnp.float32, -bound, bound)
        b = jax.random.uniform(kb, (fan_out,), jnp.float32, -bound, bound)
        w_t = w.T.astype(jnp.bfloat16)                                # (in, out) bf16 for the MXU
        b2d = b.reshape(1, fan_out)                                   # biases stay f32
        if li == 0:
            w_t = jnp.pad(w_t, ((0, IN_PAD - IN_DIM), (0, 0)))        # zero-pad K: 33 -> 40
        if li == n_layers - 1:
            w_t = jnp.pad(w_t, ((0, 0), (0, OUT_PAD - OUT_DIM)))      # zero-pad N: 4 -> 128
            b2d = jnp.pad(b2d, ((0, 0), (0, OUT_PAD - OUT_DIM)))
        params.append((w_t, b2d))
    return params


def reference_forward(x, params):
    """Pure-JAX reference with identical numerics (bf16 dot inputs, f32 accumulate)."""
    h = jnp.pad(x, ((0, 0), (0, IN_PAD - IN_DIM)))
    for i, (w, b) in enumerate(params):
        h = jnp.dot(h.astype(jnp.bfloat16), w, preferred_element_type=jnp.float32) + b
        if i < len(params) - 1:
            h = jnp.maximum(h, 0.0)
    return h[:, :OUT_DIM]


if __name__ == "__main__":
    key = jax.random.PRNGKey(0)
    key, kx = jax.random.split(key)
    params = init_params(key)

    # Small batch (single grid step, single chunk).
    B = 8
    x = jax.random.normal(kx, (B, IN_DIM), jnp.float32)
    out = jax.block_until_ready(actor_high_forward(x, params))
    ref = reference_forward(x, params)
    assert out.shape == (B, OUT_DIM), out.shape
    assert jnp.allclose(out, ref, atol=1e-3, rtol=1e-3), "mismatch vs reference (B=8)"

    # Non-divisible batch: exercises the grid, batch padding and the inner chunk loop.
    B2 = 40
    key, kx2 = jax.random.split(key)
    x2 = jax.random.normal(kx2, (B2, IN_DIM), jnp.float32)
    out2 = jax.block_until_ready(actor_high_forward(x2, params, tile_b=16, sub=8))
    ref2 = reference_forward(x2, params)
    assert out2.shape == (B2, OUT_DIM), out2.shape
    assert jnp.allclose(out2, ref2, atol=1e-3, rtol=1e-3), "mismatch vs reference (B=40)"

    # Default tile path with batch padding (clamped tile_b, unrolled inner loop).
    B3 = 300
    key, kx3 = jax.random.split(key)
    x3 = jax.random.normal(kx3, (B3, IN_DIM), jnp.float32)
    out3 = jax.block_until_ready(actor_high_forward(x3, params))
    ref3 = reference_forward(x3, params)
    assert out3.shape == (B3, OUT_DIM), out3.shape
    assert jnp.allclose(out3, ref3, atol=1e-3, rtol=1e-3), "mismatch vs reference (B=300)"

    # TODO(synk): at deployment batch sizes of ~8 rows, prefer plain XLA / vmap-stacked
    # actors over this kernel; the pallas_call only pays off at B in the thousands.
    print("KERNEL_OK")
</pallas_src>

<mosaic_0001>
module attributes {stable_mosaic.version = 11 : i64} {
  func.func @kernel(%arg0: i32, %arg1: memref<8x40xf32, #tpu.memory_space<vmem>>, %arg2: memref<40x128xbf16, #tpu.memory_space<vmem>>, %arg3: memref<1x128xf32, #tpu.memory_space<vmem>>, %arg4: memref<128x128xbf16, #tpu.memory_space<vmem>>, %arg5: memref<1x128xf32, #tpu.memory_space<vmem>>, %arg6: memref<128x128xbf16, #tpu.memory_space<vmem>>, %arg7: memref<1x128xf32, #tpu.memory_space<vmem>>, %arg8: memref<128x128xbf16, #tpu.memory_space<vmem>>, %arg9: memref<1x128xf32, #tpu.memory_space<vmem>>, %arg10: memref<128x128xbf16, #tpu.memory_space<vmem>>, %arg11: memref<1x128xf32, #tpu.memory_space<vmem>>, %arg12: memref<8x128xf32, #tpu.memory_space<vmem>>) attributes {dimension_semantics = [#tpu.dimension_semantics<parallel>], iteration_bounds = array<i64: 1>, scalar_prefetch = 0 : i64, scratch_operands = 0 : i64, tpu.core_type = #tpu.core_type<tc>, window_params = [{transform_indices = @transform_0, window_bounds = array<i64: 8, 40>}, {pipeline_mode = #tpu.pipeline_mode<synchronous>, transform_indices = @transform_1, window_bounds = array<i64: 40, 128>}, {pipeline_mode = #tpu.pipeline_mode<synchronous>, transform_indices = @transform_2, window_bounds = array<i64: 1, 128>}, {pipeline_mode = #tpu.pipeline_mode<synchronous>, transform_indices = @transform_3, window_bounds = array<i64: 128, 128>}, {pipeline_mode = #tpu.pipeline_mode<synchronous>, transform_indices = @transform_4, window_bounds = array<i64: 1, 128>}, {pipeline_mode = #tpu.pipeline_mode<synchronous>, transform_indices = @transform_5, window_bounds = array<i64: 128, 128>}, {pipeline_mode = #tpu.pipeline_mode<synchronous>, transform_indices = @transform_6, window_bounds = array<i64: 1, 128>}, {pipeline_mode = #tpu.pipeline_mode<synchronous>, transform_indices = @transform_7, window_bounds = array<i64: 128, 128>}, {pipeline_mode = #tpu.pipeline_mode<synchronous>, transform_indices = @transform_8, window_bounds = array<i64: 1, 128>}, {pipeline_mode = #tpu.pipeline_mode<synchronous>, transform_indices = @transform_9, window_bounds = array<i64: 128, 128>}, {pipeline_mode = #tpu.pipeline_mode<synchronous>, transform_indices = @transform_10, window_bounds = array<i64: 1, 128>}, {transform_indices = @transform_11, window_bounds = array<i64: 8, 128>}]} {
    %c0 = arith.constant 0 : index
    %c0_0 = arith.constant 0 : index
    %0 = vector.load %arg3[%c0, %c0_0] : memref<1x128xf32, #tpu.memory_space<vmem>>, vector<1x128xf32>
    %c0_1 = arith.constant 0 : index
    %c0_2 = arith.constant 0 : index
    %1 = vector.load %arg5[%c0_1, %c0_2] : memref<1x128xf32, #tpu.memory_space<vmem>>, vector<1x128xf32>
    %c0_3 = arith.constant 0 : index
    %c0_4 = arith.constant 0 : index
    %2 = vector.load %arg7[%c0_3, %c0_4] : memref<1x128xf32, #tpu.memory_space<vmem>>, vector<1x128xf32>
    %c0_5 = arith.constant 0 : index
    %c0_6 = arith.constant 0 : index
    %3 = vector.load %arg9[%c0_5, %c0_6] : memref<1x128xf32, #tpu.memory_space<vmem>>, vector<1x128xf32>
    %c0_7 = arith.constant 0 : index
    %c0_8 = arith.constant 0 : index
    %4 = vector.load %arg11[%c0_7, %c0_8] : memref<1x128xf32, #tpu.memory_space<vmem>>, vector<1x128xf32>
    %c0_9 = arith.constant 0 : index
    %c0_10 = arith.constant 0 : index
    %5 = vector.load %arg1[%c0_9, %c0_10] : memref<8x40xf32, #tpu.memory_space<vmem>>, vector<8x40xf32>
    %6 = arith.truncf %5 : vector<8x40xf32> to vector<8x40xbf16>
    %c0_11 = arith.constant 0 : index
    %c0_12 = arith.constant 0 : index
    %7 = vector.load %arg2[%c0_11, %c0_12] : memref<40x128xbf16, #tpu.memory_space<vmem>>, vector<40x128xbf16>
    %cst = arith.constant dense<0.000000e+00> : vector<8x128xf32>
    %8 = tpu.matmul %6, %7, %cst {dimension_numbers = #tpu.dot_dimension_numbers<[1], [0], [0], [1], [0, 0, 1, 1], [], []>} : vector<8x40xbf16>, vector<40x128xbf16>, vector<8x128xf32> -> vector<8x128xf32>
    %9 = vector.broadcast %0 : vector<1x128xf32> to vector<8x128xf32>
    %10 = arith.addf %8, %9 : vector<8x128xf32>
    %cst_13 = arith.constant 0.000000e+00 : f32
    %11 = vector.broadcast %cst_13 : f32 to vector<8x128xf32>
    %12 = arith.maximumf %10, %11 : vector<8x128xf32>
    %13 = arith.truncf %12 : vector<8x128xf32> to vector<8x128xbf16>
    %c0_14 = arith.constant 0 : index
    %c0_15 = arith.constant 0 : index
    %14 = vector.load %arg4[%c0_14, %c0_15] : memref<128x128xbf16, #tpu.memory_space<vmem>>, vector<128x128xbf16>
    %cst_16 = arith.constant dense<0.000000e+00> : vector<8x128xf32>
    %15 = tpu.matmul %13, %14, %cst_16 {dimension_numbers = #tpu.dot_dimension_numbers<[1], [0], [0], [1], [0, 0, 1, 1], [], []>} : vector<8x128xbf16>, vector<128x128xbf16>, vector<8x128xf32> -> vector<8x128xf32>
    %16 = vector.broadcast %1 : vector<1x128xf32> to vector<8x128xf32>
    %17 = arith.addf %15, %16 : vector<8x128xf32>
    %cst_17 = arith.constant 0.000000e+00 : f32
    %18 = vector.broadcast %cst_17 : f32 to vector<8x128xf32>
    %19 = arith.maximumf %17, %18 : vector<8x128xf32>
    %20 = arith.truncf %19 : vector<8x128xf32> to vector<8x128xbf16>
    %c0_18 = arith.constant 0 : index
    %c0_19 = arith.constant 0 : index
    %21 = vector.load %arg6[%c0_18, %c0_19] : memref<128x128xbf16, #tpu.memory_space<vmem>>, vector<128x128xbf16>
    %cst_20 = arith.constant dense<0.000000e+00> : vector<8x128xf32>
    %22 = tpu.matmul %20, %21, %cst_20 {dimension_numbers = #tpu.dot_dimension_numbers<[1], [0], [0], [1], [0, 0, 1, 1], [], []>} : vector<8x128xbf16>, vector<128x128xbf16>, vector<8x128xf32> -> vector<8x128xf32>
    %23 = vector.broadcast %2 : vector<1x128xf32> to vector<8x128xf32>
    %24 = arith.addf %22, %23 : vector<8x128xf32>
    %cst_21 = arith.constant 0.000000e+00 : f32
    %25 = vector.broadcast %cst_21 : f32 to vector<8x128xf32>
    %26 = arith.maximumf %24, %25 : vector<8x128xf32>
    %27 = arith.truncf %26 : vector<8x128xf32> to vector<8x128xbf16>
    %c0_22 = arith.constant 0 : index
    %c0_23 = arith.constant 0 : index
    %28 = vector.load %arg8[%c0_22, %c0_23] : memref<128x128xbf16, #tpu.memory_space<vmem>>, vector<128x128xbf16>
    %cst_24 = arith.constant dense<0.000000e+00> : vector<8x128xf32>
    %29 = tpu.matmul %27, %28, %cst_24 {dimension_numbers = #tpu.dot_dimension_numbers<[1], [0], [0], [1], [0, 0, 1, 1], [], []>} : vector<8x128xbf16>, vector<128x128xbf16>, vector<8x128xf32> -> vector<8x128xf32>
    %30 = vector.broadcast %3 : vector<1x128xf32> to vector<8x128xf32>
    %31 = arith.addf %29, %30 : vector<8x128xf32>
    %cst_25 = arith.constant 0.000000e+00 : f32
    %32 = vector.broadcast %cst_25 : f32 to vector<8x128xf32>
    %33 = arith.maximumf %31, %32 : vector<8x128xf32>
    %34 = arith.truncf %33 : vector<8x128xf32> to vector<8x128xbf16>
    %c0_26 = arith.constant 0 : index
    %c0_27 = arith.constant 0 : index
    %35 = vector.load %arg10[%c0_26, %c0_27] : memref<128x128xbf16, #tpu.memory_space<vmem>>, vector<128x128xbf16>
    %cst_28 = arith.constant dense<0.000000e+00> : vector<8x128xf32>
    %36 = tpu.matmul %34, %35, %cst_28 {dimension_numbers = #tpu.dot_dimension_numbers<[1], [0], [0], [1], [0, 0, 1, 1], [], []>} : vector<8x128xbf16>, vector<128x128xbf16>, vector<8x128xf32> -> vector<8x128xf32>
    %37 = vector.broadcast %4 : vector<1x128xf32> to vector<8x128xf32>
    %38 = arith.addf %36, %37 : vector<8x128xf32>
    %c0_29 = arith.constant 0 : index
    %c0_30 = arith.constant 0 : index
    %39 = vector.load %arg12[%c0_29, %c0_30] : memref<8x128xf32, #tpu.memory_space<vmem>>, vector<8x128xf32>
    tpu.vector_store %arg12[%c0_29, %c0_30], %38 {strides = array<i32>} : memref<8x128xf32, #tpu.memory_space<vmem>>, vector<8x128xf32>,
    return
  }
  func.func @transform_0(%arg0: i32) -> (i32, i32) {
    %c0_i32 = arith.constant 0 : i32
    %c0_i32_0 = arith.constant 0 : i32
    return %arg0, %c0_i32 : i32, i32
  }
  func.func @transform_1(%arg0: i32) -> (i32, i32) {
    %c0_i32 = arith.constant 0 : i32
    %c0_i32_0 = arith.constant 0 : i32
    %c0_i32_1 = arith.constant 0 : i32
    return %c0_i32, %c0_i32_0 : i32, i32
  }
  func.func @transform_2(%arg0: i32) -> (i32, i32) {
    %c0_i32 = arith.constant 0 : i32
    %c0_i32_0 = arith.constant 0 : i32
    %c0_i32_1 = arith.constant 0 : i32
    return %c0_i32, %c0_i32_0 : i32, i32
  }
  func.func @transform_3(%arg0: i32) -> (i32, i32) {
    %c0_i32 = arith.constant 0 : i32
    %c0_i32_0 = arith.constant 0 : i32
    %c0_i32_1 = arith.constant 0 : i32
    return %c0_i32, %c0_i32_0 : i32, i32
  }
  func.func @transform_4(%arg0: i32) -> (i32, i32) {
    %c0_i32 = arith.constant 0 : i32
    %c0_i32_0 = arith.constant 0 : i32
    %c0_i32_1 = arith.constant 0 : i32
    return %c0_i32, %c0_i32_0 : i32, i32
  }
  func.func @transform_5(%arg0: i32) -> (i32, i32) {
    %c0_i32 = arith.constant 0 : i32
    %c0_i32_0 = arith.constant 0 : i32
    %c0_i32_1 = arith.constant 0 : i32
    return %c0_i32, %c0_i32_0 : i32, i32
  }
  func.func @transform_6(%arg0: i32) -> (i32, i32) {
    %c0_i32 = arith.constant 0 : i32
    %c0_i32_0 = arith.constant 0 : i32
    %c0_i32_1 = arith.constant 0 : i32
    return %c0_i32, %c0_i32_0 : i32, i32
  }
  func.func @transform_7(%arg0: i32) -> (i32, i32) {
    %c0_i32 = arith.constant 0 : i32
    %c0_i32_0 = arith.constant 0 : i32
    %c0_i32_1 = arith.constant 0 : i32
    return %c0_i32, %c0_i32_0 : i32, i32
  }
  func.func @transform_8(%arg0: i32) -> (i32, i32) {
    %c0_i32 = arith.constant 0 : i32
    %c0_i32_0 = arith.constant 0 : i32
    %c0_i32_1 = arith.constant 0 : i32
    return %c0_i32, %c0_i32_0 : i32, i32
  }
  func.func @transform_9(%arg0: i32) -> (i32, i32) {
    %c0_i32 = arith.constant 0 : i32
    %c0_i32_0 = arith.constant 0 : i32
    %c0_i32_1 = arith.constant 0 : i32
    return %c0_i32, %c0_i32_0 : i32, i32
  }
  func.func @transform_10(%arg0: i32) -> (i32, i32) {
    %c0_i32 = arith.constant 0 : i32
    %c0_i32_0 = arith.constant 0 : i32
    %c0_i32_1 = arith.constant 0 : i32
    return %c0_i32, %c0_i32_0 : i32, i32
  }
  func.func @transform_11(%arg0: i32) -> (i32, i32) {
    %c0_i32 = arith.constant 0 : i32
    %c0_i32_0 = arith.constant 0 : i32
    return %arg0, %c0_i32 : i32, i32
  }
}

</mosaic_0001>

<llo_original>
// kernel: tpu_custom_call.1
$region0: #{tpu_custom_call.1}
  #allocation0 [shape = 'u32[]', space=smem, size = 0x4, offset = 0x4, fixed_abs, tag = 'smem constant byte address 0x4 - core index']
  #allocation1 [shape = 'u32[144,128]{1,0:T(1,128)}', space=vmem, size = 0x12000, scoped, tag = 'internal scratch']
  %s0 = inlined_call_operand.hbm [shape: f32[8,40], index: 0, kind: input, shape index: {}]
  %s1 = inlined_call_operand.hbm [shape: bf16[40,128], index: 1, kind: input, shape index: {}]
  %s2 = inlined_call_operand.vmem [shape: f32[1,128], index: 2, kind: input, shape index: {}]
  %s3 = inlined_call_operand.hbm [shape: bf16[128,128], index: 3, kind: input, shape index: {}]
  %s4 = inlined_call_operand.vmem [shape: f32[1,128], index: 4, kind: input, shape index: {}]
  %s5 = inlined_call_operand.hbm [shape: bf16[128,128], index: 5, kind: input, shape index: {}]
  %s6 = inlined_call_operand.vmem [shape: f32[1,128], index: 6, kind: input, shape index: {}]
  %s7 = inlined_call_operand.hbm [shape: bf16[128,128], index: 7, kind: input, shape index: {}]
  %s8 = inlined_call_operand.vmem [shape: f32[1,128], index: 8, kind: input, shape index: {}]
  %s9 = inlined_call_operand.hbm [shape: bf16[128,128], index: 9, kind: input, shape index: {}]
  %s10 = inlined_call_operand.vmem [shape: f32[1,128], index: 10, kind: input, shape index: {}]
  %s11 = inlined_call_operand.hbm [shape: f32[8,128], index: 11, kind: output, shape index: {}]
  %s12 = sld [smem:[#allocation0]]
  $region78: #{tpu_custom_call.1} parent=0
    _
  %s14 = ssub.s32 1, %s12
  %s15 = scalar_select 0, %s14, %s12
  $region1: #{tpu_custom_call.1} parent=0
    #allocation2 [shape = 'u8[4096]{0}', space=vmem, size = 0x1000, scoped, tag = 'input window, operand 0, single buffered']
    #allocation3 [shape = 's32[1]{0}', space=sflag, size = 0x4, scoped, tag = 'scoped memory for tpu_custom_call.1']
    #allocation4 [shape = 's32[1]{0}', space=sflag, size = 0x4, scoped, tag = 'scoped memory for tpu_custom_call.1']
    #allocation5 [shape = 'u8[10240]{0}', space=vmem, size = 0x2800, scoped, tag = 'input window, operand 1, single buffered']
    #allocation6 [shape = 's32[1]{0}', space=sflag, size = 0x4, scoped, tag = 'scoped memory for tpu_custom_call.1']
    #allocation7 [shape = 'u8[32768]{0}', space=vmem, size = 0x8000, scoped, tag = 'input window, operand 3, single buffered']
    #allocation8 [shape = 'u8[32768]{0}', space=vmem, size = 0x8000, scoped, tag = 'input window, operand 5, single buffered']
    #allocation9 [shape = 's32[1]{0}', space=sflag, size = 0x4, scoped, tag = 'scoped memory for tpu_custom_call.1']
    #allocation10 [shape = 'u8[32768]{0}', space=vmem, size = 0x8000, scoped, tag = 'input window, operand 7, single buffered']
    #allocation11 [shape = 'u8[32768]{0}', space=vmem, size = 0x8000, scoped, tag = 'input window, operand 9, single buffered']
    #allocation12 [shape = 's32[1]{0}', space=sflag, size = 0x4, scoped, tag = 'scoped memory for tpu_custom_call.1']
    #allocation13 [shape = 'u8[4096]{0}', space=vmem, size = 0x1000, scoped, tag = 'output window, operand 0, single buffered']
    %16 = vsyncpa [#allocation3], 0
    %17 = vsyncpa [#allocation6], 0
    %18 = vsyncpa [#allocation9], 0
    %19 = vsyncpa [#allocation12], 0
    %20 = vsyncpa [#allocation4], 0
    // Predicated region
    $region2: #{tpu_custom_call.1} parent=1 // pred_check
      _
    $region3: #{tpu_custom_call.1} parent=1 // pred_check_branch
      %22 = sbr.rel (0) target = $region5
    $region4: #{tpu_custom_call.1} parent=1 // pred_region
      %s24 = ssub.s32 128, 128
      %25 = vsyncadd [#allocation3], %s24
      %s27 = sshll.u32 [#allocation2], 4
      %s28 = int_to_ptr.vmem [resolvable:$true] %s27
      %30 = dma.hbm_to_vmem [thread:$0]  %s0, 128, %s28, [#allocation3]
    $region5: #{tpu_custom_call.1} parent=1 // pred_fallthru
      _
    // Predicated region
    $region6: #{tpu_custom_call.1} parent=1 // pred_check
      _
    $region7: #{tpu_custom_call.1} parent=1 // pred_check_branch
      %32 = sbr.rel (0) target = $region9
    $region8: #{tpu_custom_call.1} parent=1 // pred_region
      %s34 = ssub.s32 320, 320
      %35 = vsyncadd [#allocation6], %s34
      %s36 = sshll.u32 [#allocation5], 4
      %s37 = int_to_ptr.vmem [resolvable:$true] %s36
      %42 = dma.hbm_to_vmem [thread:$0]  %s1, 320, %s37, [#allocation6], 64, 64, 4
    $region9: #{tpu_custom_call.1} parent=1 // pred_fallthru
      _
    // Predicated region
    $region10: #{tpu_custom_call.1} parent=1 // pred_check
      _
    $region11: #{tpu_custom_call.1} parent=1 // pred_check_branch
      %44 = sbr.rel (0) target = $region13
    $region12: #{tpu_custom_call.1} parent=1 // pred_region
      _
    $region13: #{tpu_custom_call.1} parent=1 // pred_fallthru
      _
    // Predicated region
    $region14: #{tpu_custom_call.1} parent=1 // pred_check
      _
    $region15: #{tpu_custom_call.1} parent=1 // pred_check_branch
      %46 = sbr.rel (0) target = $region17
    $region16: #{tpu_custom_call.1} parent=1 // pred_region
      %s48 = ssub.s32 1024, 1024
      %49 = vsyncadd [#allocation6], %s48
      %s50 = sshll.u32 [#allocation7], 4
      %s51 = int_to_ptr.vmem [resolvable:$true] %s50
      %56 = dma.hbm_to_vmem [thread:$0]  %s3, 1024, %s51, [#allocation6], 64, 64, 4
    $region17: #{tpu_custom_call.1} parent=1 // pred_fallthru
      _
    // Predicated region
    $region18: #{tpu_custom_call.1} parent=1 // pred_check
      _
    $region19: #{tpu_custom_call.1} parent=1 // pred_check_branch
      %58 = sbr.rel (0) target = $region21
    $region20: #{tpu_custom_call.1} parent=1 // pred_region
      _
    $region21: #{tpu_custom_call.1} parent=1 // pred_fallthru
      _
    // Predicated region
    $region22: #{tpu_custom_call.1} parent=1 // pred_check
      _
    $region23: #{tpu_custom_call.1} parent=1 // pred_check_branch
      %60 = sbr.rel (0) target = $region25
    $region24: #{tpu_custom_call.1} parent=1 // pred_region
      %s62 = ssub.s32 1024, 1024
      %63 = vsyncadd [#allocation9], %s62
      %s64 = sshll.u32 [#allocation8], 4
      %s65 = int_to_ptr.vmem [resolvable:$true] %s64
      %70 = dma.hbm_to_vmem [thread:$0]  %s5, 1024, %s65, [#allocation9], 64, 64, 4
    $region25: #{tpu_custom_call.1} parent=1 // pred_fallthru
      _
    // Predicated region
    $region26: #{tpu_custom_call.1} parent=1 // pred_check
      _
    $region27: #{tpu_custom_call.1} parent=1 // pred_check_branch
      %72 = sbr.rel (0) target = $region29
    $region28: #{tpu_custom_call.1} parent=1 // pred_region
      _
    $region29: #{tpu_custom_call.1} parent=1 // pred_fallthru
      _
    // Predicated region
    $region30: #{tpu_custom_call.1} parent=1 // pred_check
      _
    $region31: #{tpu_custom_call.1} parent=1 // pred_check_branch
      %74 = sbr.rel (0) target = $region33
    $region32: #{tpu_custom_call.1} parent=1 // pred_region
      %s76 = ssub.s32 1024, 1024
      %77 = vsyncadd [#allocation9], %s76
      %s78 = sshll.u32 [#allocation10], 4
      %s79 = int_to_ptr.vmem [resolvable:$true] %s78
      %84 = dma.hbm_to_vmem [thread:$0]  %s7, 1024, %s79, [#allocation9], 64, 64, 4
    $region33: #{tpu_custom_call.1} parent=1 // pred_fallthru
      _
    // Predicated region
    $region34: #{tpu_custom_call.1} parent=1 // pred_check
      _
    $region35: #{tpu_custom_call.1} parent=1 // pred_check_branch
      %86 = sbr.rel (0) target = $region37
    $region36: #{tpu_custom_call.1} parent=1 // pred_region
      _
    $region37: #{tpu_custom_call.1} parent=1 // pred_fallthru
      _
    // Predicated region
    $region38: #{tpu_custom_call.1} parent=1 // pred_check
      _
    $region39: #{tpu_custom_call.1} parent=1 // pred_check_branch
      %88 = sbr.rel (0) target = $region41
    $region40: #{tpu_custom_call.1} parent=1 // pred_region
      %s90 = ssub.s32 1024, 1024
      %91 = vsyncadd [#allocation12], %s90
      %s92 = sshll.u32 [#allocation11], 4
      %s93 = int_to_ptr.vmem [resolvable:$true] %s92
      %98 = dma.hbm_to_vmem [thread:$0]  %s9, 1024, %s93, [#allocation12], 64, 64, 4
    $region41: #{tpu_custom_call.1} parent=1 // pred_fallthru
      _
    // Predicated region
    $region42: #{tpu_custom_call.1} parent=1 // pred_check
      _
    $region43: #{tpu_custom_call.1} parent=1 // pred_check_branch
      %100 = sbr.rel (0) target = $region45
    $region44: #{tpu_custom_call.1} parent=1 // pred_region
      _
    $region45: #{tpu_custom_call.1} parent=1 // pred_fallthru
      _
    // Predicated region
    $region46: #{tpu_custom_call.1} parent=1 // pred_check
      _
    $region47: #{tpu_custom_call.1} parent=1 // pred_check_branch
      %102 = sbr.rel (0) target = $region49
    $region48: #{tpu_custom_call.1} parent=1 // pred_region
      %103 = dma.done [#allocation3], 128
    $region49: #{tpu_custom_call.1} parent=1 // pred_fallthru
      _
    // Predicated region
    $region50: #{tpu_custom_call.1} parent=1 // pred_check
      _
    $region51: #{tpu_custom_call.1} parent=1 // pred_check_branch
      %105 = sbr.rel (0) target = $region53
    $region52: #{tpu_custom_call.1} parent=1 // pred_region
      %106 = dma.done [#allocation6], 320
    $region53: #{tpu_custom_call.1} parent=1 // pred_fallthru
      _
    // Predicated region
    $region54: #{tpu_custom_call.1} parent=1 // pred_check
      _
    $region55: #{tpu_custom_call.1} parent=1 // pred_check_branch
      %108 = sbr.rel (0) target = $region57
    $region56: #{tpu_custom_call.1} parent=1 // pred_region
      %109 = dma.done [#allocation6], 1024
    $region57: #{tpu_custom_call.1} parent=1 // pred_fallthru
      _
    // Predicated region
    $region58: #{tpu_custom_call.1} parent=1 // pred_check
      _
    $region59: #{tpu_custom_call.1} parent=1 // pred_check_branch
      %111 = sbr.rel (0) target = $region61
    $region60: #{tpu_custom_call.1} parent=1 // pred_region
      %112 = dma.done [#allocation9], 1024
    $region61: #{tpu_custom_call.1} parent=1 // pred_fallthru
      _
    // Predicated region
    $region62: #{tpu_custom_call.1} parent=1 // pred_check
      _
    $region63: #{tpu_custom_call.1} parent=1 // pred_check_branch
      %114 = sbr.rel (0) target = $region65
    $region64: #{tpu_custom_call.1} parent=1 // pred_region
      %115 = dma.done [#allocation9], 1024
    $region65: #{tpu_custom_call.1} parent=1 // pred_fallthru
      _
    // Predicated region
    $region66: #{tpu_custom_call.1} parent=1 // pred_check
      _
    $region67: #{tpu_custom_call.1} parent=1 // pred_check_branch
      %117 = sbr.rel (0) target = $region69
    $region68: #{tpu_custom_call.1} parent=1 // pred_region
      %118 = dma.done [#allocation12], 1024
    $region69: #{tpu_custom_call.1} parent=1 // pred_fallthru
      _
    %v120 = vld [vmem:[%s2] sm:$0x1]
    %v121 = vld [vmem:[%s4] sm:$0x1]
    %v122 = vld [vmem:[%s6] sm:$0x1]
    %v123 = vld [vmem:[%s8] sm:$0x1]
    %v124 = vld [vmem:[%s10] sm:$0x1]
    %v125 = vld [vmem:[#allocation2] sm:$0xff]
    %v126 = vpack.c.bf16 %v125, %v125
    %v127 = vld [vmem:[#allocation5] sm:$0xf]
    %v128 = vld [vmem:[#allocation5 + $0x4] sm:$0xf]
    %v129 = vld [vmem:[#allocation5 + $0x8] sm:$0xf]
    %v130 = vld [vmem:[#allocation5 + $0xc] sm:$0xf]
    %v131 = vld [vmem:[#allocation5 + $0x10] sm:$0xf]
    %v133 = vlaneseq
    %v134 = vshrl.u32 %v133, 7
    %v135 = vsub.s32 0, %v134
    %v136 = vrot.slane %v120, %v135
    %v143 = vunpack.c.l.b16 %v127
    %v144 = vunpack.c.l.b16 %v128
    %v145 = vunpack.c.l.b16 %v129
    %v146 = vunpack.c.l.b16 %v130
    %v147 = vunpack.c.l.b16 %v131
    %v148 = vpack.c.b16 %v144, %v143
    %v149 = vpack.c.b16 %v146, %v145
    %v150 = vpack.c.b16 %v147, %v147
    %vm153 = vcmask 326656
    %v155 = vsel %vm153, %v126, 0
    %vm157 = vcmask 1043456
    %v159 = vsel %vm157, %v150, 0
    %161 = vmatprep.subr.bf16.mxu0 0
    %162 = vmatpush1.bf16.msra.mxu0 %v148
    %163 = vmatprep.subr.bf16.mxu0 0
    %164 = vmatpush1.bf16.msra.mxu0 %v149
    %165 = vmatprep.subr.bf16.mxu0 0
    %166 = vmatpush1.bf16.msra.mxu0 %v159
    %167 = vmatprep.subr.bf16.mxu0 0
    %168 = vmatpush1.bf16.msra.mxu0 0
    %169 = vmatprep.subr.bf16.mxu0 0
    %170 = vmatpush1.bf16.msra.mxu0 0
    %171 = vmatprep.subr.bf16.mxu0 0
    %172 = vmatpush1.bf16.msra.mxu0 0
    %173 = vmatprep.subr.bf16.mxu0 0
    %174 = vmatpush1.bf16.msra.mxu0 0
    %175 = vmatprep.subr.bf16.mxu0 0
    %176 = vmatpush1.bf16.msra.mxu0 0
    %177 = vmatprep.subr.bf16.mxu0 0
    %178 = vmatpush1.bf16.msra.mxu0 0
    %179 = vmatprep.subr.bf16.mxu0 0
    %180 = vmatpush1.bf16.msra.mxu0 0
    %181 = vmatprep.subr.bf16.mxu0 0
    %182 = vmatpush1.bf16.msra.mxu0 0
    %183 = vmatprep.subr.bf16.mxu0 0
    %184 = vmatpush1.bf16.msra.mxu0 0
    %185 = vmatprep.subr.bf16.mxu0 0
    %186 = vmatpush1.bf16.msra.mxu0 0
    %187 = vmatprep.subr.bf16.mxu0 0
    %188 = vmatpush1.bf16.msra.mxu0 0
    %189 = vmatprep.subr.bf16.mxu0 0
    %190 = vmatpush1.bf16.msra.mxu0 0
    %191 = vmatprep.subr.bf16.mxu0 0
    %192 = vmatpush1.bf16.msra.mxu0 0
    %193 = vmatprep.mubr.bf16.mxu0 0
    %194 = vmatmul.mubr.bf16.gmra.mrb[0].mxu0 %v155
    %v195 = vpop.f32.mrb[0].mxu0
    %v196 = vadd.f32 %v136, %v195
    %v197 = vpop.f32.mrb[0].mxu0
    %v198 = vpop.f32.mrb[0].mxu0
    %v199 = vpop.f32.mrb[0].mxu0
    %200 = vdwg.mxu0
    %v201 = vmax.f32 %v196, 0.0
    %v202 = vpack.c.bf16 %v201, %v201
    %v203 = vld [vmem:[#allocation7] sm:$0xf]
    %v204 = vld [vmem:[#allocation7 + $0x4] sm:$0xf]
    %v205 = vld [vmem:[#allocation7 + $0x8] sm:$0xf]
    %v206 = vld [vmem:[#allocation7 + $0xc] sm:$0xf]
    %v207 = vld [vmem:[#allocation7 + $0x10] sm:$0xf]
    %v208 = vld [vmem:[#allocation7 + $0x14] sm:$0xf]
    %v209 = vld [vmem:[#allocation7 + $0x18] sm:$0xf]
    %v210 = vld [vmem:[#allocation7 + $0x1c] sm:$0xf]
    %v211 = vld [vmem:[#allocation7 + $0x20] sm:$0xf]
    %v212 = vld [vmem:[#allocation7 + $0x24] sm:$0xf]
    %v213 = vld [vmem:[#allocation7 + $0x28] sm:$0xf]
    %v214 = vld [vmem:[#allocation7 + $0x2c] sm:$0xf]
    %v215 = vld [vmem:[#allocation7 + $0x30] sm:$0xf]
    %v216 = vld [vmem:[#allocation7 + $0x34] sm:$0xf]
    %v217 = vld [vmem:[#allocation7 + $0x38] sm:$0xf]
    %v218 = vld [vmem:[#allocation7 + $0x3c] sm:$0xf]
    %v220 = vlaneseq
    %v221 = vshrl.u32 %v220, 7
    %v222 = vsub.s32 0, %v221
    %v223 = vrot.slane %v121, %v222
    %v241 = vunpack.c.l.b16 %v203
    %v242 = vunpack.c.l.b16 %v204
    %v243 = vunpack.c.l.b16 %v205
    %v244 = vunpack.c.l.b16 %v206
    %v245 = vunpack.c.l.b16 %v207
    %v246 = vunpack.c.l.b16 %v208
    %v247 = vunpack.c.l.b16 %v209
    %v248 = vunpack.c.l.b16 %v210
    %v249 = vunpack.c.l.b16 %v211
    %v250 = vunpack.c.l.b16 %v212
    %v251 = vunpack.c.l.b16 %v213
    %v252 = vunpack.c.l.b16 %v214
    %v253 = vunpack.c.l.b16 %v215
    %v254 = vunpack.c.l.b16 %v216
    %v255 = vunpack.c.l.b16 %v217
    %v256 = vunpack.c.l.b16 %v218
    %v257 = vpack.c.b16 %v242, %v241
    %v258 = vpack.c.b16 %v244, %v243
    %v259 = vpack.c.b16 %v246, %v245
    %v260 = vpack.c.b16 %v248, %v247
    %v261 = vpack.c.b16 %v250, %v249
    %v262 = vpack.c.b16 %v252, %v251
    %v263 = vpack.c.b16 %v254, %v253
    %v264 = vpack.c.b16 %v256, %v255
    %273 = vmatprep.subr.bf16.mxu0 0
    %274 = vmatpush1.bf16.msra.mxu0 %v257
    %275 = vmatprep.subr.bf16.mxu0 0
    %276 = vmatpush1.bf16.msra.mxu0 %v258
    %277 = vmatprep.subr.bf16.mxu0 0
    %278 = vmatpush1.bf16.msra.mxu0 %v259
    %279 = vmatprep.subr.bf16.mxu0 0
    %280 = vmatpush1.bf16.msra.mxu0 %v260
    %281 = vmatprep.subr.bf16.mxu0 0
    %282 = vmatpush1.bf16.msra.mxu0 %v261
    %283 = vmatprep.subr.bf16.mxu0 0
    %284 = vmatpush1.bf16.msra.mxu0 %v262
    %285 = vmatprep.subr.bf16.mxu0 0
    %286 = vmatpush1.bf16.msra.mxu0 %v263
    %287 = vmatprep.subr.bf16.mxu0 0
    %288 = vmatpush1.bf16.msra.mxu0 %v264
    %289 = vmatprep.subr.bf16.mxu0 0
    %290 = vmatpush1.bf16.msra.mxu0 0
    %291 = vmatprep.subr.bf16.mxu0 0
    %292 = vmatpush1.bf16.msra.mxu0 0
    %293 = vmatprep.subr.bf16.mxu0 0
    %294 = vmatpush1.bf16.msra.mxu0 0
    %295 = vmatprep.subr.bf16.mxu0 0
    %296 = vmatpush1.bf16.msra.mxu0 0
    %297 = vmatprep.subr.bf16.mxu0 0
    %298 = vmatpush1.bf16.msra.mxu0 0
    %299 = vmatprep.subr.bf16.mxu0 0
    %300 = vmatpush1.bf16.msra.mxu0 0
    %301 = vmatprep.subr.bf16.mxu0 0
    %302 = vmatpush1.bf16.msra.mxu0 0
    %303 = vmatprep.subr.bf16.mxu0 0
    %304 = vmatpush1.bf16.msra.mxu0 0
    %305 = vmatprep.mubr.bf16.mxu0 0
    %306 = vmatmul.mubr.bf16.gmra.mrb[0].mxu0 %v202
    %v307 = vpop.f32.mrb[0].mxu0
    %v308 = vadd.f32 %v223, %v307
    %v309 = vpop.f32.mrb[0].mxu0
    %v310 = vpop.f32.mrb[0].mxu0
    %v311 = vpop.f32.mrb[0].mxu0
    %312 = vdwg.mxu0
    %v313 = vmax.f32 %v308, 0.0
    %v314 = vpack.c.bf16 %v313, %v313
    %v315 = vld [vmem:[#allocation8] sm:$0xf]
    %v316 = vld [vmem:[#allocation8 + $0x4] sm:$0xf]
    %v317 = vld [vmem:[#allocation8 + $0x8] sm:$0xf]
    %v318 = vld [vmem:[#allocation8 + $0xc] sm:$0xf]
    %v319 = vld [vmem:[#allocation8 + $0x10] sm:$0xf]
    %v320 = vld [vmem:[#allocation8 + $0x14] sm:$0xf]
    %v321 = vld [vmem:[#allocation8 + $0x18] sm:$0xf]
    %v322 = vld [vmem:[#allocation8 + $0x1c] sm:$0xf]
    %v323 = vld [vmem:[#allocation8 + $0x20] sm:$0xf]
    %v324 = vld [vmem:[#allocation8 + $0x24] sm:$0xf]
    %v325 = vld [vmem:[#allocation8 + $0x28] sm:$0xf]
    %v326 = vld [vmem:[#allocation8 + $0x2c] sm:$0xf]
    %v327 = vld [vmem:[#allocation8 + $0x30] sm:$0xf]
    %v328 = vld [vmem:[#allocation8 + $0x34] sm:$0xf]
    %v329 = vld [vmem:[#allocation8 + $0x38] sm:$0xf]
    %v330 = vld [vmem:[#allocation8 + $0x3c] sm:$0xf]
    %v332 = vlaneseq
    %v333 = vshrl.u32 %v332, 7
    %v334 = vsub.s32 0, %v333
    %v335 = vrot.slane %v122, %v334
    %v353 = vunpack.c.l.b16 %v315
    %v354 = vunpack.c.l.b16 %v316
    %v355 = vunpack.c.l.b16 %v317
    %v356 = vunpack.c.l.b16 %v318
    %v357 = vunpack.c.l.b16 %v319
    %v358 = vunpack.c.l.b16 %v320
    %v359 = vunpack.c.l.b16 %v321
    %v360 = vunpack.c.l.b16 %v322
    %v361 = vunpack.c.l.b16 %v323
    %v362 = vunpack.c.l.b16 %v324
    %v363 = vunpack.c.l.b16 %v325
    %v364 = vunpack.c.l.b16 %v326
    %v365 = vunpack.c.l.b16 %v327
    %v366 = vunpack.c.l.b16 %v328
    %v367 = vunpack.c.l.b16 %v329
    %v368 = vunpack.c.l.b16 %v330
    %v369 = vpack.c.b16 %v354, %v353
    %v370 = vpack.c.b16 %v356, %v355
    %v371 = vpack.c.b16 %v358, %v357
    %v372 = vpack.c.b16 %v360, %v359
    %v373 = vpack.c.b16 %v362, %v361
    %v374 = vpack.c.b16 %v364, %v363
    %v375 = vpack.c.b16 %v366, %v365
    %v376 = vpack.c.b16 %v368, %v367
    %385 = vmatprep.subr.bf16.mxu0 0
    %386 = vmatpush1.bf16.msra.mxu0 %v369
    %387 = vmatprep.subr.bf16.mxu0 0
    %388 = vmatpush1.bf16.msra.mxu0 %v370
    %389 = vmatprep.subr.bf16.mxu0 0
    %390 = vmatpush1.bf16.msra.mxu0 %v371
    %391 = vmatprep.subr.bf16.mxu0 0
    %392 = vmatpush1.bf16.msra.mxu0 %v372
    %393 = vmatprep.subr.bf16.mxu0 0
    %394 = vmatpush1.bf16.msra.mxu0 %v373
    %395 = vmatprep.subr.bf16.mxu0 0
    %396 = vmatpush1.bf16.msra.mxu0 %v374
    %397 = vmatprep.subr.bf16.mxu0 0
    %398 = vmatpush1.bf16.msra.mxu0 %v375
    %399 = vmatprep.subr.bf16.mxu0 0
    %400 = vmatpush1.bf16.msra.mxu0 %v376
    %401 = vmatprep.subr.bf16.mxu0 0
    %402 = vmatpush1.bf16.msra.mxu0 0
    %403 = vmatprep.subr.bf16.mxu0 0
    %404 = vmatpush1.bf16.msra.mxu0 0
    %405 = vmatprep.subr.bf16.mxu0 0
    %406 = vmatpush1.bf16.msra.mxu0 0
    %407 = vmatprep.subr.bf16.mxu0 0
    %408 = vmatpush1.bf16.msra.mxu0 0
    %409 = vmatprep.subr.bf16.mxu0 0
    %410 = vmatpush1.bf16.msra.mxu0 0
    %411 = vmatprep.subr.bf16.mxu0 0
    %412 = vmatpush1.bf16.msra.mxu0 0
    %413 = vmatprep.subr.bf16.mxu0 0
    %414 = vmatpush1.bf16.msra.mxu0 0
    %415 = vmatprep.subr.bf16.mxu0 0
    %416 = vmatpush1.bf16.msra.mxu0 0
    %417 = vmatprep.mubr.bf16.mxu0 0
    %418 = vmatmul.mubr.bf16.gmra.mrb[0].mxu0 %v314
    %v419 = vpop.f32.mrb[0].mxu0
    %v420 = vadd.f32 %v335, %v419
    %v421 = vpop.f32.mrb[0].mxu0
    %v422 = vpop.f32.mrb[0].mxu0
    %v423 = vpop.f32.mrb[0].mxu0
    %424 = vdwg.mxu0
    %v425 = vmax.f32 %v420, 0.0
    %v426 = vpack.c.bf16 %v425, %v425
    %v427 = vld [vmem:[#allocation10] sm:$0xf]
    %v428 = vld [vmem:[#allocation10 + $0x4] sm:$0xf]
    %v429 = vld [vmem:[#allocation10 + $0x8] sm:$0xf]
    %v430 = vld [vmem:[#allocation10 + $0xc] sm:$0xf]
    %v431 = vld [vmem:[#allocation10 + $0x10] sm:$0xf]
    %v432 = vld [vmem:[#allocation10 + $0x14] sm:$0xf]
    %v433 = vld [vmem:[#allocation10 + $0x18] sm:$0xf]
    %v434 = vld [vmem:[#allocation10 + $0x1c] sm:$0xf]
    %v435 = vld [vmem:[#allocation10 + $0x20] sm:$0xf]
    %v436 = vld [vmem:[#allocation10 + $0x24] sm:$0xf]
    %v437 = vld [vmem:[#allocation10 + $0x28] sm:$0xf]
    %v438 = vld [vmem:[#allocation10 + $0x2c] sm:$0xf]
    %v439 = vld [vmem:[#allocation10 + $0x30] sm:$0xf]
    %v440 = vld [vmem:[#allocation10 + $0x34] sm:$0xf]
    %v441 = vld [vmem:[#allocation10 + $0x38] sm:$0xf]
    %v442 = vld [vmem:[#allocation10 + $0x3c] sm:$0xf]
    %v444 = vlaneseq
    %v445 = vshrl.u32 %v444, 7
    %v446 = vsub.s32 0, %v445
    %v447 = vrot.slane %v123, %v446
    %v465 = vunpack.c.l.b16 %v427
    %v466 = vunpack.c.l.b16 %v428
    %v467 = vunpack.c.l.b16 %v429
    %v468 = vunpack.c.l.b16 %v430
    %v469 = vunpack.c.l.b16 %v431
    %v470 = vunpack.c.l.b16 %v432
    %v471 = vunpack.c.l.b16 %v433
    %v472 = vunpack.c.l.b16 %v434
    %v473 = vunpack.c.l.b16 %v435
    %v474 = vunpack.c.l.b16 %v436
    %v475 = vunpack.c.l.b16 %v437
    %v476 = vunpack.c.l.b16 %v438
    %v477 = vunpack.c.l.b16 %v439
    %v478 = vunpack.c.l.b16 %v440
    %v479 = vunpack.c.l.b16 %v441
    %v480 = vunpack.c.l.b16 %v442
    %v481 = vpack.c.b16 %v466, %v465
    %v482 = vpack.c.b16 %v468, %v467
    %v483 = vpack.c.b16 %v470, %v469
    %v484 = vpack.c.b16 %v472, %v471
    %v485 = vpack.c.b16 %v474, %v473
    %v486 = vpack.c.b16 %v476, %v475
    %v487 = vpack.c.b16 %v478, %v477
    %v488 = vpack.c.b16 %v480, %v479
    %497 = vmatprep.subr.bf16.mxu0 0
    %498 = vmatpush1.bf16.msra.mxu0 %v481
    %499 = vmatprep.subr.bf16.mxu0 0
    %500 = vmatpush1.bf16.msra.mxu0 %v482
    %501 = vmatprep.subr.bf16.mxu0 0
    %502 = vmatpush1.bf16.msra.mxu0 %v483
    %503 = vmatprep.subr.bf16.mxu0 0
    %504 = vmatpush1.bf16.msra.mxu0 %v484
    %505 = vmatprep.subr.bf16.mxu0 0
    %506 = vmatpush1.bf16.msra.mxu0 %v485
    %507 = vmatprep.subr.bf16.mxu0 0
    %508 = vmatpush1.bf16.msra.mxu0 %v486
    %509 = vmatprep.subr.bf16.mxu0 0
    %510 = vmatpush1.bf16.msra.mxu0 %v487
    %511 = vmatprep.subr.bf16.mxu0 0
    %512 = vmatpush1.bf16.msra.mxu0 %v488
    %513 = vmatprep.subr.bf16.mxu0 0
    %514 = vmatpush1.bf16.msra.mxu0 0
    %515 = vmatprep.subr.bf16.mxu0 0
    %516 = vmatpush1.bf16.msra.mxu0 0
    %517 = vmatprep.subr.bf16.mxu0 0
    %518 = vmatpush1.bf16.msra.mxu0 0
    %519 = vmatprep.subr.bf16.mxu0 0
    %520 = vmatpush1.bf16.msra.mxu0 0
    %521 = vmatprep.subr.bf16.mxu0 0
    %522 = vmatpush1.bf16.msra.mxu0 0
    %523 = vmatprep.subr.bf16.mxu0 0
    %524 = vmatpush1.bf16.msra.mxu0 0
    %525 = vmatprep.subr.bf16.mxu0 0
    %526 = vmatpush1.bf16.msra.mxu0 0
    %527 = vmatprep.subr.bf16.mxu0 0
    %528 = vmatpush1.bf16.msra.mxu0 0
    %529 = vmatprep.mubr.bf16.mxu0 0
    %530 = vmatmul.mubr.bf16.gmra.mrb[0].mxu0 %v426
    %v531 = vpop.f32.mrb[0].mxu0
    %v532 = vadd.f32 %v447, %v531
    %v533 = vpop.f32.mrb[0].mxu0
    %v534 = vpop.f32.mrb[0].mxu0
    %v535 = vpop.f32.mrb[0].mxu0
    %536 = vdwg.mxu0
    %v537 = vmax.f32 %v532, 0.0
    %v538 = vpack.c.bf16 %v537, %v537
    %v539 = vld [vmem:[#allocation11] sm:$0xf]
    %v540 = vld [vmem:[#allocation11 + $0x4] sm:$0xf]
    %v541 = vld [vmem:[#allocation11 + $0x8] sm:$0xf]
    %v542 = vld [vmem:[#allocation11 + $0xc] sm:$0xf]
    %v543 = vld [vmem:[#allocation11 + $0x10] sm:$0xf]
    %v544 = vld [vmem:[#allocation11 + $0x14] sm:$0xf]
    %v545 = vld [vmem:[#allocation11 + $0x18] sm:$0xf]
    %v546 = vld [vmem:[#allocation11 + $0x1c] sm:$0xf]
    %v547 = vld [vmem:[#allocation11 + $0x20] sm:$0xf]
    %v548 = vld [vmem:[#allocation11 + $0x24] sm:$0xf]
    %v549 = vld [vmem:[#allocation11 + $0x28] sm:$0xf]
    %v550 = vld [vmem:[#allocation11 + $0x2c] sm:$0xf]
    %v551 = vld [vmem:[#allocation11 + $0x30] sm:$0xf]
    %v552 = vld [vmem:[#allocation11 + $0x34] sm:$0xf]
    %v553 = vld [vmem:[#allocation11 + $0x38] sm:$0xf]
    %v554 = vld [vmem:[#allocation11 + $0x3c] sm:$0xf]
    %v556 = vlaneseq
    %v557 = vshrl.u32 %v556, 7
    %v558 = vsub.s32 0, %v557
    %v559 = vrot.slane %v124, %v558
    %v577 = vunpack.c.l.b16 %v539
    %v578 = vunpack.c.l.b16 %v540
    %v579 = vunpack.c.l.b16 %v541
    %v580 = vunpack.c.l.b16 %v542
    %v581 = vunpack.c.l.b16 %v543
    %v582 = vunpack.c.l.b16 %v544
    %v583 = vunpack.c.l.b16 %v545
    %v584 = vunpack.c.l.b16 %v546
    %v585 = vunpack.c.l.b16 %v547
    %v586 = vunpack.c.l.b16 %v548
    %v587 = vunpack.c.l.b16 %v549
    %v588 = vunpack.c.l.b16 %v550
    %v589 = vunpack.c.l.b16 %v551
    %v590 = vunpack.c.l.b16 %v552
    %v591 = vunpack.c.l.b16 %v553
    %v592 = vunpack.c.l.b16 %v554
    %v593 = vpack.c.b16 %v578, %v577
    %v594 = vpack.c.b16 %v580, %v579
    %v595 = vpack.c.b16 %v582, %v581
    %v596 = vpack.c.b16 %v584, %v583
    %v597 = vpack.c.b16 %v586, %v585
    %v598 = vpack.c.b16 %v588, %v587
    %v599 = vpack.c.b16 %v590, %v589
    %v600 = vpack.c.b16 %v592, %v591
    %609 = vmatprep.subr.bf16.mxu0 0
    %610 = vmatpush1.bf16.msra.mxu0 %v593
    %611 = vmatprep.subr.bf16.mxu0 0
    %612 = vmatpush1.bf16.msra.mxu0 %v594
    %613 = vmatprep.subr.bf16.mxu0 0
    %614 = vmatpush1.bf16.msra.mxu0 %v595
    %615 = vmatprep.subr.bf16.mxu0 0
    %616 = vmatpush1.bf16.msra.mxu0 %v596
    %617 = vmatprep.subr.bf16.mxu0 0
    %618 = vmatpush1.bf16.msra.mxu0 %v597
    %619 = vmatprep.subr.bf16.mxu0 0
    %620 = vmatpush1.bf16.msra.mxu0 %v598
    %621 = vmatprep.subr.bf16.mxu0 0
    %622 = vmatpush1.bf16.msra.mxu0 %v599
    %623 = vmatprep.subr.bf16.mxu0 0
    %624 = vmatpush1.bf16.msra.mxu0 %v600
    %625 = vmatprep.subr.bf16.mxu0 0
    %626 = vmatpush1.bf16.msra.mxu0 0
    %627 = vmatprep.subr.bf16.mxu0 0
    %628 = vmatpush1.bf16.msra.mxu0 0
    %629 = vmatprep.subr.bf16.mxu0 0
    %630 = vmatpush1.bf16.msra.mxu0 0
    %631 = vmatprep.subr.bf16.mxu0 0
    %632 = vmatpush1.bf16.msra.mxu0 0
    %633 = vmatprep.subr.bf16.mxu0 0
    %634 = vmatpush1.bf16.msra.mxu0 0
    %635 = vmatprep.subr.bf16.mxu0 0
    %636 = vmatpush1.bf16.msra.mxu0 0
    %637 = vmatprep.subr.bf16.mxu0 0
    %638 = vmatpush1.bf16.msra.mxu0 0
    %639 = vmatprep.subr.bf16.mxu0 0
    %640 = vmatpush1.bf16.msra.mxu0 0
    %641 = vmatprep.mubr.bf16.mxu0 0
    %642 = vmatmul.mubr.bf16.gmra.mrb[0].mxu0 %v538
    %v643 = vpop.f32.mrb[0].mxu0
    %v644 = vadd.f32 %v559, %v643
    %v645 = vpop.f32.mrb[0].mxu0
    %v646 = vpop.f32.mrb[0].mxu0
    %v647 = vpop.f32.mrb[0].mxu0
    %648 = vdwg.mxu0
    %649 = vst [vmem:[#allocation13] sm:$0xff] %v644
    // Predicated region
    $region70: #{tpu_custom_call.1} parent=1 // pred_check
      _
    $region71: #{tpu_custom_call.1} parent=1 // pred_check_branch
      %651 = sbr.rel (0) target = $region73
    $region72: #{tpu_custom_call.1} parent=1 // pred_region
      %s653 = ssub.s32 128, 128
      %654 = vsyncadd [#allocation4], %s653
      %s656 = sshll.u32 [#allocation13], 4
      %s657 = int_to_ptr.vmem [resolvable:$true] %s656
      %659 = dma.vmem_to_hbm [thread:$0]  %s657, 128, %s11, [#allocation4]
    $region73: #{tpu_custom_call.1} parent=1 // pred_fallthru
      _
    // Predicated region
    $region74: #{tpu_custom_call.1} parent=1 // pred_check
      _
    $region75: #{tpu_custom_call.1} parent=1 // pred_check_branch
      %661 = sbr.rel (0) target = $region77
    $region76: #{tpu_custom_call.1} parent=1 // pred_region
      %662 = dma.done [#allocation4], 128
    $region77: #{tpu_custom_call.1} parent=1 // pred_fallthru
      _
    %663 = vsyncpa [#allocation3], 1
    %664 = vsyncpa [#allocation6], 1
    %665 = vsyncpa [#allocation9], 1
    %666 = vsyncpa [#allocation12], 1
    %667 = vsyncpa [#allocation4], 1

</llo_original>
